<compile_context>
chip_gen: v6e
topology: v6e:2x2x1
jax: 0.10.0
libtpu: 0.0.40
codegen_flags: <defaults>
</compile_context>

<pallas_src>
import functools

import jax
import jax.numpy as jnp
from jax.experimental import pallas as pl
from jax.experimental.pallas import tpu as pltpu

_LANE = 128       # TPU lane width
_SUBLANE = 8      # f32 sublane width
_MAX_TILE_B = 2048  # rows per grid step cap (per-step VMEM stays ~a few MiB)


def _round_up(x, m):
    return ((x + m - 1) // m) * m


def _cdiv(a, b):
    return -(-a // b)


def _device_kind():
    try:
        return (getattr(jax.devices()[0], "device_kind", "") or "").lower()
    except Exception:
        return ""


def _num_tensorcores():
    """Best-effort TensorCore count of the local chip (2 on v7x, else 1)."""
    kind = _device_kind()
    if "v7" in kind:
        return 2
    try:
        return max(1, int(getattr(jax.devices()[0], "num_cores", 1) or 1))
    except Exception:
        return 1


def _default_weight_dtype():
    kind = _device_kind()
    if "v6" in kind or "v7" in kind:
        return jnp.bfloat16   # fast MXU path; accumulation stays f32
    return jnp.float32


def _pad_to(x, shape):
    pads = [(0, t - s) for s, t in zip(x.shape, shape)]
    if all(p == (0, 0) for p in pads):
        return x
    return jnp.pad(x, pads)


# ---------------------------------------------------------------------------
# One-time parameter preparation (hoisted out of the forward call path).
# ---------------------------------------------------------------------------
def prepare_params(params, weight_dtype=None):
    """Pad hidden dim to the 128-lane width and cast weights, once.

    Zero padding is mathematically inert: padded weight columns/rows and biases
    are zero and ReLU(0)=0.  The output (action) dim is NOT padded.
    """
    if weight_dtype is None:
        weight_dtype = _default_weight_dtype()
    S, H = params["w1"].shape
    A = params["w3"].shape[1]
    H_pad = _round_up(H, _LANE)
    return {
        "w1": _pad_to(params["w1"], (S, H_pad)).astype(weight_dtype),
        "b1": _pad_to(params["b1"].reshape(1, -1), (1, H_pad)).astype(jnp.float32),
        "w2": _pad_to(params["w2"], (H_pad, H_pad)).astype(weight_dtype),
        "b2": _pad_to(params["b2"].reshape(1, -1), (1, H_pad)).astype(jnp.float32),
        "w3": _pad_to(params["w3"], (H_pad, A)).astype(weight_dtype),
        "b3": params["b3"].reshape(1, -1).astype(jnp.float32),
    }


# ---------------------------------------------------------------------------
# Kernel: all three matmuls + bias + ReLU fused; one invocation per batch tile.
# ---------------------------------------------------------------------------
def _qnet_kernel(x_ref, w1_ref, b1_ref, w2_ref, b2_ref, w3_ref, b3_ref, o_ref):
    wt = w1_ref.dtype
    x = x_ref[...].astype(wt)
    h1 = jnp.dot(x, w1_ref[...], preferred_element_type=jnp.float32) + b1_ref[...]
    h1 = jnp.maximum(h1, 0.0)
    h2 = jnp.dot(h1.astype(wt), w2_ref[...], preferred_element_type=jnp.float32) + b2_ref[...]
    h2 = jnp.maximum(h2, 0.0)
    out = jnp.dot(h2.astype(wt), w3_ref[...], preferred_element_type=jnp.float32) + b3_ref[...]
    o_ref[...] = out.astype(o_ref.dtype)


def _choose_tile_b(B):
    B8 = _round_up(max(B, _SUBLANE), _SUBLANE)
    if B < 16:
        return B8  # single tiny tile
    # Target 2 grid steps: overlap on 1-TC chips, one tile per TC on v7x.
    half = _round_up(_cdiv(B, 2), _SUBLANE)
    return max(_SUBLANE, min(half, _MAX_TILE_B, B8))


@functools.partial(jax.jit, static_argnames=("tile_b",))
def qnetwork_forward(state, prepared, *, tile_b=None):
    """Pallas forward pass of QNetwork.

    state:    (B, state_size) float32
    prepared: output of prepare_params() (padded / pre-cast weights & biases)
    """
    B, S = state.shape
    H_pad = prepared["w1"].shape[1]
    A = prepared["w3"].shape[1]

    num_cores = _num_tensorcores()
    if tile_b is None:
        tile_b = _choose_tile_b(B)
    else:
        tile_b = min(_round_up(max(tile_b, _SUBLANE), _SUBLANE),
                     _round_up(B, _SUBLANE))

    n_steps = _cdiv(B, tile_b)
    if num_cores >= 2 and n_steps > 1 and n_steps % 2 == 1:
        n_steps += 1  # even step count -> clean 2-TensorCore split on v7x only
    B_pad = n_steps * tile_b
    state_p = _pad_to(state, (B_pad, S))

    w_bytes = (
        prepared["w1"].size * prepared["w1"].dtype.itemsize
        + prepared["w2"].size * prepared["w2"].dtype.itemsize
        + prepared["w3"].size * prepared["w3"].dtype.itemsize
        + (prepared["b1"].size + prepared["b2"].size + prepared["b3"].size) * 4
    )
    cost = pl.CostEstimate(
        flops=2 * B_pad * (S * H_pad + H_pad * H_pad + H_pad * A),
        transcendentals=0,
        bytes_accessed=B_pad * S * 4 + w_bytes + B_pad * A * 4,
    )

    out = pl.pallas_call(
        _qnet_kernel,
        out_shape=jax.ShapeDtypeStruct((B_pad, A), jnp.float32),
        grid=(n_steps,),
        in_specs=[
            pl.BlockSpec((tile_b, S), lambda i: (i, 0)),      # state tile (streams)
            pl.BlockSpec((S, H_pad), lambda i: (0, 0)),       # w1 (resident)
            pl.BlockSpec((1, H_pad), lambda i: (0, 0)),       # b1
            pl.BlockSpec((H_pad, H_pad), lambda i: (0, 0)),   # w2
            pl.BlockSpec((1, H_pad), lambda i: (0, 0)),       # b2
            pl.BlockSpec((H_pad, A), lambda i: (0, 0)),       # w3 (output dim unpadded)
            pl.BlockSpec((1, A), lambda i: (0, 0)),           # b3
        ],
        out_specs=pl.BlockSpec((tile_b, A), lambda i: (i, 0)),  # unpadded A lanes
        compiler_params=pltpu.CompilerParams(
            dimension_semantics=("parallel",),   # megacore-shardable batch axis
        ),
        cost_estimate=cost,
    )(state_p, prepared["w1"], prepared["b1"], prepared["w2"],
      prepared["b2"], prepared["w3"], prepared["b3"])

    return out[:B] if B_pad != B else out


# ---------------------------------------------------------------------------
# Init + plain-JAX reference (for correctness checks).
# ---------------------------------------------------------------------------
def init_qnetwork_params(key, state_size, action_size, hidden_size=64):
    """Init mirroring PyTorch nn.Linear default (U[-1/sqrt(fan_in), +1/sqrt(fan_in)]).

    Weights stored as (in_features, out_features) — transposed vs. torch's (out, in).
    """
    def linear(k, fan_in, fan_out):
        kw, kb = jax.random.split(k)
        bound = 1.0 / jnp.sqrt(fan_in)
        w = jax.random.uniform(kw, (fan_in, fan_out), jnp.float32, -bound, bound)
        b = jax.random.uniform(kb, (1, fan_out), jnp.float32, -bound, bound)
        return w, b

    k1, k2, k3 = jax.random.split(key, 3)
    w1, b1 = linear(k1, state_size, hidden_size)
    w2, b2 = linear(k2, hidden_size, hidden_size)
    w3, b3 = linear(k3, hidden_size, action_size)
    return {"w1": w1, "b1": b1, "w2": w2, "b2": b2, "w3": w3, "b3": b3}


def qnetwork_reference(state, params):
    h1 = jnp.maximum(state @ params["w1"] + params["b1"], 0.0)
    h2 = jnp.maximum(h1 @ params["w2"] + params["b2"], 0.0)
    return h2 @ params["w3"] + params["b3"]


if __name__ == "__main__":
    # Shapes consistent with the module: state_size=8, hidden=64, action=4.
    STATE, HIDDEN, ACTION = 8, 64, 4

    key = jax.random.PRNGKey(0)
    k_params, k_small, k_big = jax.random.split(key, 3)
    params = init_qnetwork_params(k_params, STATE, ACTION, HIDDEN)

    # f32 weights: bit-exact vs reference.
    prepared_f32 = prepare_params(params, weight_dtype=jnp.float32)

    # Small inference-style batch (single grid step).
    state_small = jax.random.normal(k_small, (8, STATE), jnp.float32)
    out_small = jax.block_until_ready(qnetwork_forward(state_small, prepared_f32))
    ref_small = qnetwork_reference(state_small, params)
    assert out_small.shape == (8, ACTION), out_small.shape
    assert jnp.allclose(out_small, ref_small, atol=1e-5, rtol=1e-5), "mismatch (B=8, f32)"

    # Larger training-style batch: exercises the multi-step (tiled) grid path.
    state_big = jax.random.normal(k_big, (1024, STATE), jnp.float32)
    out_big = jax.block_until_ready(qnetwork_forward(state_big, prepared_f32))
    ref_big = qnetwork_reference(state_big, params)
    assert out_big.shape == (1024, ACTION), out_big.shape
    assert jnp.allclose(out_big, ref_big, atol=1e-5, rtol=1e-5), "mismatch (B=1024, f32)"

    # Hardware-default weight dtype (bf16 on v6e/v7x, f32 elsewhere): looser tolerance
    # since activations get quantized to bf16 on the fast-MXU path.
    prepared_auto = prepare_params(params)
    out_auto = jax.block_until_ready(qnetwork_forward(state_small, prepared_auto))
    assert out_auto.shape == (8, ACTION), out_auto.shape
    assert jnp.allclose(out_auto, ref_small, atol=1e-1, rtol=1e-1), "mismatch (auto dtype)"

    print("KERNEL_OK")
</pallas_src>

<mosaic_0001>
module attributes {stable_mosaic.version = 11 : i64} {
  func.func @_qnet_kernel(%arg0: i32, %arg1: memref<8x8xf32, #tpu.memory_space<vmem>>, %arg2: memref<8x128xf32, #tpu.memory_space<vmem>>, %arg3: memref<1x128xf32, #tpu.memory_space<vmem>>, %arg4: memref<128x128xf32, #tpu.memory_space<vmem>>, %arg5: memref<1x128xf32, #tpu.memory_space<vmem>>, %arg6: memref<128x4xf32, #tpu.memory_space<vmem>>, %arg7: memref<1x4xf32, #tpu.memory_space<vmem>>, %arg8: memref<8x4xf32, #tpu.memory_space<vmem>>) attributes {dimension_semantics = [#tpu.dimension_semantics<parallel>], iteration_bounds = array<i64: 1>, scalar_prefetch = 0 : i64, scratch_operands = 0 : i64, tpu.core_type = #tpu.core_type<tc>, window_params = [{transform_indices = @transform_0, window_bounds = array<i64: 8, 8>}, {pipeline_mode = #tpu.pipeline_mode<synchronous>, transform_indices = @transform_1, window_bounds = array<i64: 8, 128>}, {pipeline_mode = #tpu.pipeline_mode<synchronous>, transform_indices = @transform_2, window_bounds = array<i64: 1, 128>}, {pipeline_mode = #tpu.pipeline_mode<synchronous>, transform_indices = @transform_3, window_bounds = array<i64: 128, 128>}, {pipeline_mode = #tpu.pipeline_mode<synchronous>, transform_indices = @transform_4, window_bounds = array<i64: 1, 128>}, {pipeline_mode = #tpu.pipeline_mode<synchronous>, transform_indices = @transform_5, window_bounds = array<i64: 128, 4>}, {pipeline_mode = #tpu.pipeline_mode<synchronous>, transform_indices = @transform_6, window_bounds = array<i64: 1, 4>}, {transform_indices = @transform_7, window_bounds = array<i64: 8, 4>}]} {
    %c0 = arith.constant 0 : index
    %c0_0 = arith.constant 0 : index
    %0 = vector.load %arg1[%c0, %c0_0] : memref<8x8xf32, #tpu.memory_space<vmem>>, vector<8x8xf32>
    %c0_1 = arith.constant 0 : index
    %c0_2 = arith.constant 0 : index
    %1 = vector.load %arg2[%c0_1, %c0_2] : memref<8x128xf32, #tpu.memory_space<vmem>>, vector<8x128xf32>
    %cst = arith.constant dense<0.000000e+00> : vector<8x128xf32>
    %2 = tpu.matmul %0, %1, %cst {dimension_numbers = #tpu.dot_dimension_numbers<[1], [0], [0], [1], [0, 0, 1, 1], [], []>} : vector<8x8xf32>, vector<8x128xf32>, vector<8x128xf32> -> vector<8x128xf32>
    %c0_3 = arith.constant 0 : index
    %c0_4 = arith.constant 0 : index
    %3 = vector.load %arg3[%c0_3, %c0_4] : memref<1x128xf32, #tpu.memory_space<vmem>>, vector<1x128xf32>
    %4 = vector.broadcast %3 : vector<1x128xf32> to vector<8x128xf32>
    %5 = arith.addf %2, %4 : vector<8x128xf32>
    %cst_5 = arith.constant 0.000000e+00 : f32
    %6 = vector.broadcast %cst_5 : f32 to vector<8x128xf32>
    %7 = arith.maximumf %5, %6 : vector<8x128xf32>
    %c0_6 = arith.constant 0 : index
    %c0_7 = arith.constant 0 : index
    %8 = vector.load %arg4[%c0_6, %c0_7] : memref<128x128xf32, #tpu.memory_space<vmem>>, vector<128x128xf32>
    %cst_8 = arith.constant dense<0.000000e+00> : vector<8x128xf32>
    %9 = tpu.matmul %7, %8, %cst_8 {dimension_numbers = #tpu.dot_dimension_numbers<[1], [0], [0], [1], [0, 0, 1, 1], [], []>} : vector<8x128xf32>, vector<128x128xf32>, vector<8x128xf32> -> vector<8x128xf32>
    %c0_9 = arith.constant 0 : index
    %c0_10 = arith.constant 0 : index
    %10 = vector.load %arg5[%c0_9, %c0_10] : memref<1x128xf32, #tpu.memory_space<vmem>>, vector<1x128xf32>
    %11 = vector.broadcast %10 : vector<1x128xf32> to vector<8x128xf32>
    %12 = arith.addf %9, %11 : vector<8x128xf32>
    %cst_11 = arith.constant 0.000000e+00 : f32
    %13 = vector.broadcast %cst_11 : f32 to vector<8x128xf32>
    %14 = arith.maximumf %12, %13 : vector<8x128xf32>
    %c0_12 = arith.constant 0 : index
    %c0_13 = arith.constant 0 : index
    %15 = vector.load %arg6[%c0_12, %c0_13] : memref<128x4xf32, #tpu.memory_space<vmem>>, vector<128x4xf32>
    %cst_14 = arith.constant dense<0.000000e+00> : vector<8x4xf32>
    %16 = tpu.matmul %14, %15, %cst_14 {dimension_numbers = #tpu.dot_dimension_numbers<[1], [0], [0], [1], [0, 0, 1, 1], [], []>} : vector<8x128xf32>, vector<128x4xf32>, vector<8x4xf32> -> vector<8x4xf32>
    %c0_15 = arith.constant 0 : index
    %c0_16 = arith.constant 0 : index
    %17 = vector.load %arg7[%c0_15, %c0_16] : memref<1x4xf32, #tpu.memory_space<vmem>>, vector<1x4xf32>
    %18 = vector.broadcast %17 : vector<1x4xf32> to vector<8x4xf32>
    %19 = arith.addf %16, %18 : vector<8x4xf32>
    %c0_17 = arith.constant 0 : index
    %c0_18 = arith.constant 0 : index
    %20 = vector.load %arg8[%c0_17, %c0_18] : memref<8x4xf32, #tpu.memory_space<vmem>>, vector<8x4xf32>
    tpu.vector_store %arg8[%c0_17, %c0_18], %19 {strides = array<i32>} : memref<8x4xf32, #tpu.memory_space<vmem>>, vector<8x4xf32>,
    return
  }
  func.func @transform_0(%arg0: i32) -> (i32, i32) {
    %c0_i32 = arith.constant 0 : i32
    %c0_i32_0 = arith.constant 0 : i32
    return %arg0, %c0_i32 : i32, i32
  }
  func.func @transform_1(%arg0: i32) -> (i32, i32) {
    %c0_i32 = arith.constant 0 : i32
    %c0_i32_0 = arith.constant 0 : i32
    %c0_i32_1 = arith.constant 0 : i32
    return %c0_i32, %c0_i32_0 : i32, i32
  }
  func.func @transform_2(%arg0: i32) -> (i32, i32) {
    %c0_i32 = arith.constant 0 : i32
    %c0_i32_0 = arith.constant 0 : i32
    %c0_i32_1 = arith.constant 0 : i32
    return %c0_i32, %c0_i32_0 : i32, i32
  }
  func.func @transform_3(%arg0: i32) -> (i32, i32) {
    %c0_i32 = arith.constant 0 : i32
    %c0_i32_0 = arith.constant 0 : i32
    %c0_i32_1 = arith.constant 0 : i32
    return %c0_i32, %c0_i32_0 : i32, i32
  }
  func.func @transform_4(%arg0: i32) -> (i32, i32) {
    %c0_i32 = arith.constant 0 : i32
    %c0_i32_0 = arith.constant 0 : i32
    %c0_i32_1 = arith.constant 0 : i32
    return %c0_i32, %c0_i32_0 : i32, i32
  }
  func.func @transform_5(%arg0: i32) -> (i32, i32) {
    %c0_i32 = arith.constant 0 : i32
    %c0_i32_0 = arith.constant 0 : i32
    %c0_i32_1 = arith.constant 0 : i32
    return %c0_i32, %c0_i32_0 : i32, i32
  }
  func.func @transform_6(%arg0: i32) -> (i32, i32) {
    %c0_i32 = arith.constant 0 : i32
    %c0_i32_0 = arith.constant 0 : i32
    %c0_i32_1 = arith.constant 0 : i32
    return %c0_i32, %c0_i32_0 : i32, i32
  }
  func.func @transform_7(%arg0: i32) -> (i32, i32) {
    %c0_i32 = arith.constant 0 : i32
    %c0_i32_0 = arith.constant 0 : i32
    return %arg0, %c0_i32 : i32, i32
  }
}

</mosaic_0001>

<llo_original>
// kernel: qnetwork_forward.1
$region0: #{qnetwork_forward.1}
  #allocation0 [shape = 'u32[]', space=smem, size = 0x4, offset = 0x4, fixed_abs, tag = 'smem constant byte address 0x4 - core index']
  #allocation1 [shape = 'u32[144,128]{1,0:T(1,128)}', space=vmem, size = 0x12000, scoped, tag = 'internal scratch']
  %s0 = inlined_call_operand.vmem [shape: f32[8,8], index: 0, kind: input, shape index: {}]
  %s1 = inlined_call_operand.hbm [shape: f32[8,128], index: 1, kind: input, shape index: {}]
  %s2 = inlined_call_operand.vmem [shape: f32[1,128], index: 2, kind: input, shape index: {}]
  %s3 = inlined_call_operand.vmem [shape: f32[128,128], index: 3, kind: input, shape index: {}]
  %s4 = inlined_call_operand.vmem [shape: f32[1,128], index: 4, kind: input, shape index: {}]
  %s5 = inlined_call_operand.vmem [shape: f32[128,4], index: 5, kind: input, shape index: {}]
  %s6 = inlined_call_operand.hbm [shape: f32[1,4], index: 6, kind: input, shape index: {}]
  %s7 = inlined_call_operand.vmem [shape: f32[8,4], index: 7, kind: output, shape index: {}]
  %s8 = sld [smem:[#allocation0]]
  $region46: #{qnetwork_forward.1} parent=0
    _
  %s10 = ssub.s32 1, %s8
  %s11 = scalar_select 0, %s10, %s8
  $region1: #{qnetwork_forward.1} parent=0
    #allocation2 [shape = 'u8[4096]{0}', space=vmem, size = 0x1000, scoped, tag = 'input window, operand 1, single buffered']
    #allocation3 [shape = 's32[1]{0}', space=sflag, size = 0x4, scoped, tag = 'scoped memory for qnetwork_forward.1']
    #allocation4 [shape = 'u8[512]{0}', space=vmem, size = 0x400, scoped, tag = 'input window, operand 6, single buffered']
    #allocation5 [shape = 's32[1]{0}', space=sflag, size = 0x4, scoped, tag = 'scoped memory for qnetwork_forward.1']
    %12 = vsyncpa [#allocation3], 0
    %13 = vsyncpa [#allocation5], 0
    // Predicated region
    $region2: #{qnetwork_forward.1} parent=1 // pred_check
      _
    $region3: #{qnetwork_forward.1} parent=1 // pred_check_branch
      %15 = sbr.rel (0) target = $region5
    $region4: #{qnetwork_forward.1} parent=1 // pred_region
      _
    $region5: #{qnetwork_forward.1} parent=1 // pred_fallthru
      _
    // Predicated region
    $region6: #{qnetwork_forward.1} parent=1 // pred_check
      _
    $region7: #{qnetwork_forward.1} parent=1 // pred_check_branch
      %17 = sbr.rel (0) target = $region9
    $region8: #{qnetwork_forward.1} parent=1 // pred_region
      %s19 = ssub.s32 128, 128
      %20 = vsyncadd [#allocation3], %s19
      %s22 = sshll.u32 [#allocation2], 4
      %s23 = int_to_ptr.vmem [resolvable:$true] %s22
      %25 = dma.hbm_to_vmem [thread:$0]  %s1, 128, %s23, [#allocation3]
    $region9: #{qnetwork_forward.1} parent=1 // pred_fallthru
      _
    // Predicated region
    $region10: #{qnetwork_forward.1} parent=1 // pred_check
      _
    $region11: #{qnetwork_forward.1} parent=1 // pred_check_branch
      %27 = sbr.rel (0) target = $region13
    $region12: #{qnetwork_forward.1} parent=1 // pred_region
      _
    $region13: #{qnetwork_forward.1} parent=1 // pred_fallthru
      _
    // Predicated region
    $region14: #{qnetwork_forward.1} parent=1 // pred_check
      _
    $region15: #{qnetwork_forward.1} parent=1 // pred_check_branch
      %29 = sbr.rel (0) target = $region17
    $region16: #{qnetwork_forward.1} parent=1 // pred_region
      _
    $region17: #{qnetwork_forward.1} parent=1 // pred_fallthru
      _
    // Predicated region
    $region18: #{qnetwork_forward.1} parent=1 // pred_check
      _
    $region19: #{qnetwork_forward.1} parent=1 // pred_check_branch
      %31 = sbr.rel (0) target = $region21
    $region20: #{qnetwork_forward.1} parent=1 // pred_region
      _
    $region21: #{qnetwork_forward.1} parent=1 // pred_fallthru
      _
    // Predicated region
    $region22: #{qnetwork_forward.1} parent=1 // pred_check
      _
    $region23: #{qnetwork_forward.1} parent=1 // pred_check_branch
      %33 = sbr.rel (0) target = $region25
    $region24: #{qnetwork_forward.1} parent=1 // pred_region
      _
    $region25: #{qnetwork_forward.1} parent=1 // pred_fallthru
      _
    // Predicated region
    $region26: #{qnetwork_forward.1} parent=1 // pred_check
      _
    $region27: #{qnetwork_forward.1} parent=1 // pred_check_branch
      %35 = sbr.rel (0) target = $region29
    $region28: #{qnetwork_forward.1} parent=1 // pred_region
      %s37 = ssub.s32 16, 16
      %38 = vsyncadd [#allocation5], %s37
      %s40 = sshll.u32 [#allocation4], 4
      %s41 = int_to_ptr.vmem [resolvable:$true] %s40
      %43 = dma.hbm_to_vmem [thread:$0]  %s6, 16, %s41, [#allocation5]
    $region29: #{qnetwork_forward.1} parent=1 // pred_fallthru
      _
    // Predicated region
    $region30: #{qnetwork_forward.1} parent=1 // pred_check
      _
    $region31: #{qnetwork_forward.1} parent=1 // pred_check_branch
      %45 = sbr.rel (0) target = $region33
    $region32: #{qnetwork_forward.1} parent=1 // pred_region
      %46 = dma.done [#allocation3], 128
    $region33: #{qnetwork_forward.1} parent=1 // pred_fallthru
      _
    // Predicated region
    $region34: #{qnetwork_forward.1} parent=1 // pred_check
      _
    $region35: #{qnetwork_forward.1} parent=1 // pred_check_branch
      %48 = sbr.rel (0) target = $region37
    $region36: #{qnetwork_forward.1} parent=1 // pred_region
      %49 = dma.done [#allocation5], 16
    $region37: #{qnetwork_forward.1} parent=1 // pred_fallthru
      _
    %v50 = vld [vmem:[%s0] sm:$0xff]
    %v51 = vld [vmem:[#allocation2] sm:$0xff]
    %v52 = vld [vmem:[%s2] sm:$0x1]
    %v54 = vlaneseq
    %v55 = vshrl.u32 %v54, 7
    %v56 = vsub.s32 0, %v55
    %v57 = vrot.slane %v52, %v56
    %vm59 = vcmask 64512
    %v61 = vsel %vm59, %v50, 0
    %63 = vmatprep.subr.mxu0 0.0
    %64 = vmatpush1.msra.mxu0 0.0
    %65 = vmatprep.subr.mxu0 0.0
    %66 = vmatpush1.msra.mxu0 0.0
    %67 = vmatprep.subr.mxu0 0.0
    %68 = vmatpush1.msra.mxu0 0.0
    %69 = vmatprep.subr.mxu0 0.0
    %70 = vmatpush1.msra.mxu0 0.0
    %71 = vmatprep.subr.mxu0 0.0
    %72 = vmatpush1.msra.mxu0 0.0
    %73 = vmatprep.subr.mxu0 0.0
    %74 = vmatpush1.msra.mxu0 0.0
    %75 = vmatprep.subr.mxu0 0.0
    %76 = vmatpush1.msra.mxu0 0.0
    %77 = vmatprep.subr.mxu0 0.0
    %78 = vmatpush1.msra.mxu0 0.0
    %79 = vmatprep.subr.mxu0 0.0
    %80 = vmatpush1.msra.mxu0 0.0
    %81 = vmatprep.subr.mxu0 0.0
    %82 = vmatpush1.msra.mxu0 0.0
    %83 = vmatprep.subr.mxu0 0.0
    %84 = vmatpush1.msra.mxu0 0.0
    %85 = vmatprep.subr.mxu0 0.0
    %86 = vmatpush1.msra.mxu0 0.0
    %87 = vmatprep.subr.mxu0 0.0
    %88 = vmatpush1.msra.mxu0 0.0
    %89 = vmatprep.subr.mxu0 0.0
    %90 = vmatpush1.msra.mxu0 0.0
    %91 = vmatprep.subr.mxu0 0.0
    %92 = vmatpush1.msra.mxu0 0.0
    %93 = vmatprep.subr.mxu0 0.0
    %94 = vmatpush1.msra.mxu0 %v51
    %95 = vmatprep.subr.mxu0 0.0
    %96 = vmatpush2.msra.mxu0 0.0
    %97 = vmatprep.subr.mxu0 0.0
    %98 = vmatpush2.msra.mxu0 0.0
    %99 = vmatprep.subr.mxu0 0.0
    %100 = vmatpush2.msra.mxu0 0.0
    %101 = vmatprep.subr.mxu0 0.0
    %102 = vmatpush2.msra.mxu0 0.0
    %103 = vmatprep.subr.mxu0 0.0
    %104 = vmatpush2.msra.mxu0 0.0
    %105 = vmatprep.subr.mxu0 0.0
    %106 = vmatpush2.msra.mxu0 0.0
    %107 = vmatprep.subr.mxu0 0.0
    %108 = vmatpush2.msra.mxu0 0.0
    %109 = vmatprep.subr.mxu0 0.0
    %110 = vmatpush2.msra.mxu0 0.0
    %111 = vmatprep.subr.mxu0 0.0
    %112 = vmatpush2.msra.mxu0 0.0
    %113 = vmatprep.subr.mxu0 0.0
    %114 = vmatpush2.msra.mxu0 0.0
    %115 = vmatprep.subr.mxu0 0.0
    %116 = vmatpush2.msra.mxu0 0.0
    %117 = vmatprep.subr.mxu0 0.0
    %118 = vmatpush2.msra.mxu0 0.0
    %119 = vmatprep.subr.mxu0 0.0
    %120 = vmatpush2.msra.mxu0 0.0
    %121 = vmatprep.subr.mxu0 0.0
    %122 = vmatpush2.msra.mxu0 0.0
    %123 = vmatprep.subr.mxu0 0.0
    %124 = vmatpush2.msra.mxu0 0.0
    %125 = vmatprep.subr.mxu0 0.0
    %126 = vmatpush2.msra.mxu0 0.0
    %127 = vmatprep.mubr.f32.mxu0 0.0
    %128 = vmatmul.mubr.f32.gmra.mxu0 %v61
    %v129 = vpop.f32.mrf.mxu0
    %v130 = vadd.f32 %v57, %v129
    %v131 = vpop.f32.mrf.mxu0
    %132 = vdwg.mxu0
    %v133 = vmax.f32 %v130, 0.0
    %v134 = vld [vmem:[%s3] sm:$0xff]
    %v135 = vld [vmem:[%s3 + $0x8] sm:$0xff]
    %v136 = vld [vmem:[%s3 + $0x10] sm:$0xff]
    %v137 = vld [vmem:[%s3 + $0x18] sm:$0xff]
    %v138 = vld [vmem:[%s3 + $0x20] sm:$0xff]
    %v139 = vld [vmem:[%s3 + $0x28] sm:$0xff]
    %v140 = vld [vmem:[%s3 + $0x30] sm:$0xff]
    %v141 = vld [vmem:[%s3 + $0x38] sm:$0xff]
    %v142 = vld [vmem:[%s3 + $0x40] sm:$0xff]
    %v143 = vld [vmem:[%s3 + $0x48] sm:$0xff]
    %v144 = vld [vmem:[%s3 + $0x50] sm:$0xff]
    %v145 = vld [vmem:[%s3 + $0x58] sm:$0xff]
    %v146 = vld [vmem:[%s3 + $0x60] sm:$0xff]
    %v147 = vld [vmem:[%s3 + $0x68] sm:$0xff]
    %v148 = vld [vmem:[%s3 + $0x70] sm:$0xff]
    %v149 = vld [vmem:[%s3 + $0x78] sm:$0xff]
    %v150 = vld [vmem:[%s4] sm:$0x1]
    %v152 = vlaneseq
    %v153 = vshrl.u32 %v152, 7
    %v154 = vsub.s32 0, %v153
    %v155 = vrot.slane %v150, %v154
    %157 = vmatprep.subr.mxu0 0.0
    %158 = vmatpush1.msra.mxu0 %v149
    %159 = vmatprep.subr.mxu0 0.0
    %160 = vmatpush1.msra.mxu0 %v148
    %161 = vmatprep.subr.mxu0 0.0
    %162 = vmatpush1.msra.mxu0 %v147
    %163 = vmatprep.subr.mxu0 0.0
    %164 = vmatpush1.msra.mxu0 %v146
    %165 = vmatprep.subr.mxu0 0.0
    %166 = vmatpush1.msra.mxu0 %v145
    %167 = vmatprep.subr.mxu0 0.0
    %168 = vmatpush1.msra.mxu0 %v144
    %169 = vmatprep.subr.mxu0 0.0
    %170 = vmatpush1.msra.mxu0 %v143
    %171 = vmatprep.subr.mxu0 0.0
    %172 = vmatpush1.msra.mxu0 %v142
    %173 = vmatprep.subr.mxu0 0.0
    %174 = vmatpush1.msra.mxu0 %v141
    %175 = vmatprep.subr.mxu0 0.0
    %176 = vmatpush1.msra.mxu0 %v140
    %177 = vmatprep.subr.mxu0 0.0
    %178 = vmatpush1.msra.mxu0 %v139
    %179 = vmatprep.subr.mxu0 0.0
    %180 = vmatpush1.msra.mxu0 %v138
    %181 = vmatprep.subr.mxu0 0.0
    %182 = vmatpush1.msra.mxu0 %v137
    %183 = vmatprep.subr.mxu0 0.0
    %184 = vmatpush1.msra.mxu0 %v136
    %185 = vmatprep.subr.mxu0 0.0
    %186 = vmatpush1.msra.mxu0 %v135
    %187 = vmatprep.subr.mxu0 0.0
    %188 = vmatpush1.msra.mxu0 %v134
    %189 = vmatprep.subr.mxu0 0.0
    %190 = vmatpush2.msra.mxu0 0.0
    %191 = vmatprep.subr.mxu0 0.0
    %192 = vmatpush2.msra.mxu0 0.0
    %193 = vmatprep.subr.mxu0 0.0
    %194 = vmatpush2.msra.mxu0 0.0
    %195 = vmatprep.subr.mxu0 0.0
    %196 = vmatpush2.msra.mxu0 0.0
    %197 = vmatprep.subr.mxu0 0.0
    %198 = vmatpush2.msra.mxu0 0.0
    %199 = vmatprep.subr.mxu0 0.0
    %200 = vmatpush2.msra.mxu0 0.0
    %201 = vmatprep.subr.mxu0 0.0
    %202 = vmatpush2.msra.mxu0 0.0
    %203 = vmatprep.subr.mxu0 0.0
    %204 = vmatpush2.msra.mxu0 0.0
    %205 = vmatprep.subr.mxu0 0.0
    %206 = vmatpush2.msra.mxu0 0.0
    %207 = vmatprep.subr.mxu0 0.0
    %208 = vmatpush2.msra.mxu0 0.0
    %209 = vmatprep.subr.mxu0 0.0
    %210 = vmatpush2.msra.mxu0 0.0
    %211 = vmatprep.subr.mxu0 0.0
    %212 = vmatpush2.msra.mxu0 0.0
    %213 = vmatprep.subr.mxu0 0.0
    %214 = vmatpush2.msra.mxu0 0.0
    %215 = vmatprep.subr.mxu0 0.0
    %216 = vmatpush2.msra.mxu0 0.0
    %217 = vmatprep.subr.mxu0 0.0
    %218 = vmatpush2.msra.mxu0 0.0
    %219 = vmatprep.subr.mxu0 0.0
    %220 = vmatpush2.msra.mxu0 0.0
    %221 = vmatprep.mubr.f32.mxu0 0.0
    %222 = vmatmul.mubr.f32.gmra.mxu0 %v133
    %v223 = vpop.f32.mrf.mxu0
    %v224 = vadd.f32 %v155, %v223
    %v225 = vpop.f32.mrf.mxu0
    %226 = vdwg.mxu0
    %v227 = vmax.f32 %v224, 0.0
    %v228 = vld [vmem:[%s5] sm:$0xff]
    %v229 = vld [vmem:[%s5 + $0x8] sm:$0xff]
    %v230 = vld [vmem:[%s5 + $0x10] sm:$0xff]
    %v231 = vld [vmem:[%s5 + $0x18] sm:$0xff]
    %v232 = vld [vmem:[%s5 + $0x20] sm:$0xff]
    %v233 = vld [vmem:[%s5 + $0x28] sm:$0xff]
    %v234 = vld [vmem:[%s5 + $0x30] sm:$0xff]
    %v235 = vld [vmem:[%s5 + $0x38] sm:$0xff]
    %v236 = vld [vmem:[%s5 + $0x40] sm:$0xff]
    %v237 = vld [vmem:[%s5 + $0x48] sm:$0xff]
    %v238 = vld [vmem:[%s5 + $0x50] sm:$0xff]
    %v239 = vld [vmem:[%s5 + $0x58] sm:$0xff]
    %v240 = vld [vmem:[%s5 + $0x60] sm:$0xff]
    %v241 = vld [vmem:[%s5 + $0x68] sm:$0xff]
    %v242 = vld [vmem:[%s5 + $0x70] sm:$0xff]
    %v243 = vld [vmem:[%s5 + $0x78] sm:$0xff]
    %v244 = vld [vmem:[#allocation4] sm:$0x1]
    %v246 = vlaneseq
    %v247 = vshrl.u32 %v246, 7
    %v248 = vsub.s32 0, %v247
    %v249 = vrot.slane %v244, %v248
    %251 = vmatprep.subr.mxu0 0.0
    %252 = vmatpush1.msra.mxu0 %v243
    %253 = vmatprep.subr.mxu0 0.0
    %254 = vmatpush1.msra.mxu0 %v242
    %255 = vmatprep.subr.mxu0 0.0
    %256 = vmatpush1.msra.mxu0 %v241
    %257 = vmatprep.subr.mxu0 0.0
    %258 = vmatpush1.msra.mxu0 %v240
    %259 = vmatprep.subr.mxu0 0.0
    %260 = vmatpush1.msra.mxu0 %v239
    %261 = vmatprep.subr.mxu0 0.0
    %262 = vmatpush1.msra.mxu0 %v238
    %263 = vmatprep.subr.mxu0 0.0
    %264 = vmatpush1.msra.mxu0 %v237
    %265 = vmatprep.subr.mxu0 0.0
    %266 = vmatpush1.msra.mxu0 %v236
    %267 = vmatprep.subr.mxu0 0.0
    %268 = vmatpush1.msra.mxu0 %v235
    %269 = vmatprep.subr.mxu0 0.0
    %270 = vmatpush1.msra.mxu0 %v234
    %271 = vmatprep.subr.mxu0 0.0
    %272 = vmatpush1.msra.mxu0 %v233
    %273 = vmatprep.subr.mxu0 0.0
    %274 = vmatpush1.msra.mxu0 %v232
    %275 = vmatprep.subr.mxu0 0.0
    %276 = vmatpush1.msra.mxu0 %v231
    %277 = vmatprep.subr.mxu0 0.0
    %278 = vmatpush1.msra.mxu0 %v230
    %279 = vmatprep.subr.mxu0 0.0
    %280 = vmatpush1.msra.mxu0 %v229
    %281 = vmatprep.subr.mxu0 0.0
    %282 = vmatpush1.msra.mxu0 %v228
    %283 = vmatprep.subr.mxu0 0.0
    %284 = vmatpush2.msra.mxu0 0.0
    %285 = vmatprep.subr.mxu0 0.0
    %286 = vmatpush2.msra.mxu0 0.0
    %287 = vmatprep.subr.mxu0 0.0
    %288 = vmatpush2.msra.mxu0 0.0
    %289 = vmatprep.subr.mxu0 0.0
    %290 = vmatpush2.msra.mxu0 0.0
    %291 = vmatprep.subr.mxu0 0.0
    %292 = vmatpush2.msra.mxu0 0.0
    %293 = vmatprep.subr.mxu0 0.0
    %294 = vmatpush2.msra.mxu0 0.0
    %295 = vmatprep.subr.mxu0 0.0
    %296 = vmatpush2.msra.mxu0 0.0
    %297 = vmatprep.subr.mxu0 0.0
    %298 = vmatpush2.msra.mxu0 0.0
    %299 = vmatprep.subr.mxu0 0.0
    %300 = vmatpush2.msra.mxu0 0.0
    %301 = vmatprep.subr.mxu0 0.0
    %302 = vmatpush2.msra.mxu0 0.0
    %303 = vmatprep.subr.mxu0 0.0
    %304 = vmatpush2.msra.mxu0 0.0
    %305 = vmatprep.subr.mxu0 0.0
    %306 = vmatpush2.msra.mxu0 0.0
    %307 = vmatprep.subr.mxu0 0.0
    %308 = vmatpush2.msra.mxu0 0.0
    %309 = vmatprep.subr.mxu0 0.0
    %310 = vmatpush2.msra.mxu0 0.0
    %311 = vmatprep.subr.mxu0 0.0
    %312 = vmatpush2.msra.mxu0 0.0
    %313 = vmatprep.subr.mxu0 0.0
    %314 = vmatpush2.msra.mxu0 0.0
    %315 = vmatprep.mubr.f32.mxu0 0.0
    %316 = vmatmul.mubr.f32.gmra.mxu0 %v227
    %v317 = vpop.f32.mrf.mxu0
    %v318 = vadd.f32 %v249, %v317
    %v319 = vpop.f32.mrf.mxu0
    %320 = vdwg.mxu0
    %vm321 = vcmask 31744
    %322 = vst.msk [vmem:[%s7] sm:$0xff] %vm321, %v318
    // Predicated region
    $region38: #{qnetwork_forward.1} parent=1 // pred_check
      _
    $region39: #{qnetwork_forward.1} parent=1 // pred_check_branch
      %324 = sbr.rel (0) target = $region41
    $region40: #{qnetwork_forward.1} parent=1 // pred_region
      _
    $region41: #{qnetwork_forward.1} parent=1 // pred_fallthru
      _
    // Predicated region
    $region42: #{qnetwork_forward.1} parent=1 // pred_check
      _
    $region43: #{qnetwork_forward.1} parent=1 // pred_check_branch
      %326 = sbr.rel (0) target = $region45
    $region44: #{qnetwork_forward.1} parent=1 // pred_region
      _
    $region45: #{qnetwork_forward.1} parent=1 // pred_fallthru
      _
    %327 = vsyncpa [#allocation3], 1
    %328 = vsyncpa [#allocation5], 1

</llo_original>
